<compile_context>
chip_gen: v6e
topology: v6e:2x2x1
jax: 0.10.0
libtpu: 0.0.40
codegen_flags: <defaults>
</compile_context>

<pallas_src>
from functools import partial

import numpy as np
import jax
import jax.numpy as jnp
from jax.experimental import pallas as pl
from jax.experimental.pallas import tpu as pltpu


def _round_up(x, m):
    return ((x + m - 1) // m) * m


def _vnode_kernel(cell_ref, pos_ref, out_ref, *,
                  gx, gy, gz, tile_g, repulsion_distance):
    """Per G-tile:
         g          = tile_start + row                      (in-kernel iota)
         (i,j,k)    = decompose(g)  ;  frac = (i/gx, j/gy, k/gz)
         cart       = fx*cell_row0 + fy*cell_row1 + fz*cell_row2   (VPU FMAs)
         d2[r,a]    = (cx-px)^2 + (cy-py)^2 + (cz-pz)^2             (VPU)
         mind       = sqrt(min_a d2)                                (XLU + 1 sqrt/row)
         keep       = mind >= repulsion_distance
       Output lanes: 0..2 = cart, 3 = mind, 4 = keep, rest = 0.
    """
    g0 = pl.program_id(0) * tile_g
    row = jax.lax.broadcasted_iota(jnp.int32, (tile_g, 1), 0) + g0
    g_f = row.astype(jnp.float32)

    # Integer decomposition done in f32: exact for G < 2^24 (f32 division is
    # correctly rounded and all operands are exactly representable integers).
    gygz = float(gy * gz)
    i_f = jnp.floor(g_f / gygz)
    rem = g_f - i_f * gygz
    j_f = jnp.floor(rem / float(gz))
    k_f = rem - j_f * float(gz)
    fx = i_f / float(gx)
    fy = j_f / float(gy)
    fz = k_f / float(gz)

    # 9 lattice entries as SMEM scalars; cart = frac @ cell via broadcast FMAs.
    c = [cell_ref[idx] for idx in range(9)]            # row-major cell[r, c]
    cx = fx * c[0] + fy * c[3] + fz * c[6]             # (tile_g, 1)
    cy = fx * c[1] + fy * c[4] + fz * c[7]
    cz = fx * c[2] + fy * c[5] + fz * c[8]

    # Atom positions: rows 0..2 of a (8, N_pad) slab; padded atoms sit at 1e4
    # so they never win the min.
    px = pos_ref[0:1, :]                               # (1, N)
    py = pos_ref[1:2, :]
    pz = pos_ref[2:3, :]

    dx = cx - px                                       # (tile_g, N)
    dy = cy - py
    dz = cz - pz
    d2 = dx * dx + dy * dy + dz * dz

    mind2 = jnp.min(d2, axis=-1, keepdims=True)        # (tile_g, 1)
    mind = jnp.sqrt(mind2)                             # sqrt AFTER the min
    keep = (mind >= repulsion_distance).astype(jnp.float32)

    # Pack everything into one lane-dense (tile_g, 128) store.
    lane = jax.lax.broadcasted_iota(jnp.int32, (tile_g, 128), 1)
    out = jnp.where(lane == 0, cx, 0.0)
    out = jnp.where(lane == 1, cy, out)
    out = jnp.where(lane == 2, cz, out)
    out = jnp.where(lane == 3, mind, out)
    out = jnp.where(lane == 4, keep, out)
    out_ref[...] = out


@partial(jax.jit, static_argnames=("num_grids", "repulsion_distance", "tile_g"))
def pallas_vnode_distances(cell, pos, num_grids, repulsion_distance,
                           tile_g=512):
    """Returns a (G_pad, 128) f32 array: lanes 0..2 cart grid pos, lane 3 min
    distance to any atom, lane 4 keep-mask (1.0 = becomes a virtual node)."""
    gx, gy, gz = (int(v) for v in num_grids)
    G = gx * gy * gz

    tg = min(int(tile_g), _round_up(G, 8))
    tg = _round_up(tg, 8)
    g_pad = _round_up(G, tg)

    n_atoms = pos.shape[0]
    n_pad = max(128, _round_up(max(n_atoms, 1), 128))

    # (8, N_pad) atom slab: rows 0..2 = x/y/z, padded atom columns at 1e4.
    pos_rows = jnp.zeros((8, n_pad), jnp.float32)
    pos_rows = pos_rows.at[:3, :].set(1e4)
    pos_rows = pos_rows.at[:3, :n_atoms].set(pos.astype(jnp.float32).T)

    cell_flat = cell.astype(jnp.float32).reshape(9)    # row-major lattice

    kernel = partial(_vnode_kernel, gx=gx, gy=gy, gz=gz, tile_g=tg,
                     repulsion_distance=float(repulsion_distance))

    return pl.pallas_call(
        kernel,
        out_shape=jax.ShapeDtypeStruct((g_pad, 128), jnp.float32),
        grid=(g_pad // tg,),
        in_specs=[
            pl.BlockSpec(memory_space=pltpu.MemorySpace.SMEM),   # cell scalars
            pl.BlockSpec((8, n_pad), lambda i: (0, 0)),          # atom slab
        ],
        out_specs=pl.BlockSpec((tg, 128), lambda i: (i, 0)),
        compiler_params=pltpu.CompilerParams(
            dimension_semantics=("parallel",),
            vmem_limit_bytes=32 * 1024 * 1024),
    )(cell_flat, pos_rows)


def add_virtual_nodes(pos, atomic_numbers, cell,
                      num_grids, repulsion_distance, vnode_z):
    """JAX/Pallas equivalent of BaseModule.add_virtual_nodes (+ get_grid_poses)."""
    gx, gy, gz = (int(v) for v in num_grids)
    G = gx * gy * gz
    n_atoms = pos.shape[0]

    packed = pallas_vnode_distances(cell, pos, (gx, gy, gz),
                                    float(repulsion_distance))
    grid_poses = packed[:G, 0:3]                    # (G, 3) cartesian
    min_distances = packed[:G, 3]                   # (G,)
    mask_dev = packed[:G, 4] > 0.5                  # (G,) bool, still on device

    # Dynamic-shape boolean compaction (matches torch boolean indexing).
    mask = np.asarray(mask_dev)
    filtered_grid_poses = np.asarray(grid_poses)[mask]
    n_filtered = filtered_grid_poses.shape[0]

    pos_added = jnp.concatenate(
        [pos.astype(jnp.float32),
         jnp.asarray(filtered_grid_poses, jnp.float32)], axis=0)
    x_added = jnp.concatenate(
        [atomic_numbers.astype(jnp.int32),
         jnp.full((n_filtered,), vnode_z, dtype=jnp.int32)], axis=0)
    return pos_added, x_added, grid_poses, min_distances, mask


if __name__ == "__main__":
    key = jax.random.PRNGKey(0)
    repulsion_distance = 1.5
    vnode_z = 120
    cell = jnp.array([[5.0, 0.0, 0.0],
                      [0.5, 6.0, 0.0],
                      [0.0, 0.3, 7.0]], dtype=jnp.float32)

    configs = [
        dict(num_grids=(4, 4, 4), n_atoms=5),    # G = 64
        dict(num_grids=(3, 4, 5), n_atoms=7),    # G = 60 -> exercises row padding
    ]

    for cfg in configs:
        key, k_pos, k_z = jax.random.split(key, 3)
        num_grids = cfg["num_grids"]
        n_atoms = cfg["n_atoms"]

        frac_atoms = jax.random.uniform(k_pos, (n_atoms, 3), dtype=jnp.float32)
        pos = frac_atoms @ cell                                   # cartesian atoms
        atomic_numbers = jax.random.randint(k_z, (n_atoms,), 1, 50,
                                            dtype=jnp.int32)

        pos_added, x_added, grid_poses, min_d, mask = add_virtual_nodes(
            pos, atomic_numbers, cell, num_grids, repulsion_distance, vnode_z)
        jax.block_until_ready((pos_added, x_added, grid_poses, min_d))

        # Reference check in numpy (mirrors torch.cdist + min + mask).
        gx, gy, gz = num_grids
        ii, jj, kk = np.meshgrid(np.arange(gx), np.arange(gy), np.arange(gz),
                                 indexing="ij")
        frac_np = np.stack([ii / gx, jj / gy, kk / gz], -1).reshape(-1, 3)
        grid_np = frac_np.astype(np.float32) @ np.asarray(cell)
        diff = grid_np[:, None, :] - np.asarray(pos)[None, :, :]
        dist_np = np.sqrt((diff ** 2).sum(-1))
        min_np = dist_np.min(axis=1)
        mask_np = min_np >= repulsion_distance

        assert np.allclose(np.asarray(grid_poses), grid_np, atol=1e-4), \
            "grid poses mismatch"
        assert np.allclose(np.asarray(min_d), min_np, atol=1e-3), \
            "min distance mismatch"
        assert np.array_equal(np.asarray(mask), mask_np), "mask mismatch"
        assert pos_added.shape[0] == n_atoms + int(mask_np.sum())
        if mask_np.sum() > 0:
            assert int(x_added[-1]) == vnode_z

    print("KERNEL_OK")
</pallas_src>

<mosaic_0001>
module attributes {stable_mosaic.version = 11 : i64} {
  func.func @_vnode_kernel(%arg0: i32, %arg1: memref<9xf32, #tpu.memory_space<smem>>, %arg2: memref<8x128xf32, #tpu.memory_space<vmem>>, %arg3: memref<64x128xf32, #tpu.memory_space<vmem>>) attributes {dimension_semantics = [#tpu.dimension_semantics<parallel>], iteration_bounds = array<i64: 1>, scalar_prefetch = 0 : i64, scratch_operands = 0 : i64, tpu.core_type = #tpu.core_type<tc>, window_params = [{transform_indices = @transform_0, window_bounds = array<i64: 9>}, {pipeline_mode = #tpu.pipeline_mode<synchronous>, transform_indices = @transform_1, window_bounds = array<i64: 8, 128>}, {transform_indices = @transform_2, window_bounds = array<i64: 64, 128>}]} {
    %c64_i32 = arith.constant 64 : i32
    %0 = arith.muli %arg0, %c64_i32 : i32
    %1 = tpu.iota {dimensions = array<i32: 0>} : vector<64x1xi32>
    %2 = vector.broadcast %0 : i32 to vector<64x1xi32>
    %3 = arith.addi %1, %2 : vector<64x1xi32>
    %4 = arith.sitofp %3 : vector<64x1xi32> to vector<64x1xf32>
    %cst = arith.constant 1.600000e+01 : f32
    %5 = vector.broadcast %cst : f32 to vector<64x1xf32>
    %6 = arith.divf %4, %5 : vector<64x1xf32>
    %7 = math.floor %6 : vector<64x1xf32>
    %cst_0 = arith.constant 1.600000e+01 : f32
    %8 = vector.broadcast %cst_0 : f32 to vector<64x1xf32>
    %9 = arith.mulf %7, %8 : vector<64x1xf32>
    %10 = arith.subf %4, %9 : vector<64x1xf32>
    %cst_1 = arith.constant 4.000000e+00 : f32
    %11 = vector.broadcast %cst_1 : f32 to vector<64x1xf32>
    %12 = arith.divf %10, %11 : vector<64x1xf32>
    %13 = math.floor %12 : vector<64x1xf32>
    %cst_2 = arith.constant 4.000000e+00 : f32
    %14 = vector.broadcast %cst_2 : f32 to vector<64x1xf32>
    %15 = arith.mulf %13, %14 : vector<64x1xf32>
    %16 = arith.subf %10, %15 : vector<64x1xf32>
    %cst_3 = arith.constant 4.000000e+00 : f32
    %17 = vector.broadcast %cst_3 : f32 to vector<64x1xf32>
    %18 = arith.divf %7, %17 : vector<64x1xf32>
    %cst_4 = arith.constant 4.000000e+00 : f32
    %19 = vector.broadcast %cst_4 : f32 to vector<64x1xf32>
    %20 = arith.divf %13, %19 : vector<64x1xf32>
    %cst_5 = arith.constant 4.000000e+00 : f32
    %21 = vector.broadcast %cst_5 : f32 to vector<64x1xf32>
    %22 = arith.divf %16, %21 : vector<64x1xf32>
    %c0 = arith.constant 0 : index
    %23 = memref.load %arg1[%c0] : memref<9xf32, #tpu.memory_space<smem>>
    %c1 = arith.constant 1 : index
    %24 = memref.load %arg1[%c1] : memref<9xf32, #tpu.memory_space<smem>>
    %c2 = arith.constant 2 : index
    %25 = memref.load %arg1[%c2] : memref<9xf32, #tpu.memory_space<smem>>
    %c3 = arith.constant 3 : index
    %26 = memref.load %arg1[%c3] : memref<9xf32, #tpu.memory_space<smem>>
    %c4 = arith.constant 4 : index
    %27 = memref.load %arg1[%c4] : memref<9xf32, #tpu.memory_space<smem>>
    %c5 = arith.constant 5 : index
    %28 = memref.load %arg1[%c5] : memref<9xf32, #tpu.memory_space<smem>>
    %c6 = arith.constant 6 : index
    %29 = memref.load %arg1[%c6] : memref<9xf32, #tpu.memory_space<smem>>
    %c7 = arith.constant 7 : index
    %30 = memref.load %arg1[%c7] : memref<9xf32, #tpu.memory_space<smem>>
    %c8 = arith.constant 8 : index
    %31 = memref.load %arg1[%c8] : memref<9xf32, #tpu.memory_space<smem>>
    %32 = vector.broadcast %23 : f32 to vector<64x1xf32>
    %33 = arith.mulf %18, %32 : vector<64x1xf32>
    %34 = vector.broadcast %26 : f32 to vector<64x1xf32>
    %35 = arith.mulf %20, %34 : vector<64x1xf32>
    %36 = arith.addf %33, %35 : vector<64x1xf32>
    %37 = vector.broadcast %29 : f32 to vector<64x1xf32>
    %38 = arith.mulf %22, %37 : vector<64x1xf32>
    %39 = arith.addf %36, %38 : vector<64x1xf32>
    %40 = vector.broadcast %24 : f32 to vector<64x1xf32>
    %41 = arith.mulf %18, %40 : vector<64x1xf32>
    %42 = vector.broadcast %27 : f32 to vector<64x1xf32>
    %43 = arith.mulf %20, %42 : vector<64x1xf32>
    %44 = arith.addf %41, %43 : vector<64x1xf32>
    %45 = vector.broadcast %30 : f32 to vector<64x1xf32>
    %46 = arith.mulf %22, %45 : vector<64x1xf32>
    %47 = arith.addf %44, %46 : vector<64x1xf32>
    %48 = vector.broadcast %25 : f32 to vector<64x1xf32>
    %49 = arith.mulf %18, %48 : vector<64x1xf32>
    %50 = vector.broadcast %28 : f32 to vector<64x1xf32>
    %51 = arith.mulf %20, %50 : vector<64x1xf32>
    %52 = arith.addf %49, %51 : vector<64x1xf32>
    %53 = vector.broadcast %31 : f32 to vector<64x1xf32>
    %54 = arith.mulf %22, %53 : vector<64x1xf32>
    %55 = arith.addf %52, %54 : vector<64x1xf32>
    %c0_6 = arith.constant 0 : index
    %c0_7 = arith.constant 0 : index
    %56 = vector.load %arg2[%c0_6, %c0_7] : memref<8x128xf32, #tpu.memory_space<vmem>>, vector<1x128xf32>
    %c1_8 = arith.constant 1 : index
    %c0_9 = arith.constant 0 : index
    %57 = vector.load %arg2[%c1_8, %c0_9] : memref<8x128xf32, #tpu.memory_space<vmem>>, vector<1x128xf32>
    %c2_10 = arith.constant 2 : index
    %c0_11 = arith.constant 0 : index
    %58 = vector.load %arg2[%c2_10, %c0_11] : memref<8x128xf32, #tpu.memory_space<vmem>>, vector<1x128xf32>
    %59 = vector.broadcast %39 : vector<64x1xf32> to vector<64x128xf32>
    %60 = vector.broadcast %56 : vector<1x128xf32> to vector<64x128xf32>
    %61 = arith.subf %59, %60 : vector<64x128xf32>
    %62 = vector.broadcast %47 : vector<64x1xf32> to vector<64x128xf32>
    %63 = vector.broadcast %57 : vector<1x128xf32> to vector<64x128xf32>
    %64 = arith.subf %62, %63 : vector<64x128xf32>
    %65 = vector.broadcast %55 : vector<64x1xf32> to vector<64x128xf32>
    %66 = vector.broadcast %58 : vector<1x128xf32> to vector<64x128xf32>
    %67 = arith.subf %65, %66 : vector<64x128xf32>
    %68 = arith.mulf %61, %61 : vector<64x128xf32>
    %69 = arith.mulf %64, %64 : vector<64x128xf32>
    %70 = arith.addf %68, %69 : vector<64x128xf32>
    %71 = arith.mulf %67, %67 : vector<64x128xf32>
    %72 = arith.addf %70, %71 : vector<64x128xf32>
    %cst_12 = arith.constant dense<0x7F800000> : vector<64xf32>
    %73 = vector.multi_reduction <minimumf>, %72, %cst_12 [1] : vector<64x128xf32> to vector<64xf32>
    %74 = vector.shape_cast %73 : vector<64xf32> to vector<64x1xf32>
    %75 = math.sqrt %74 : vector<64x1xf32>
    %cst_13 = arith.constant 1.500000e+00 : f32
    %76 = vector.broadcast %cst_13 : f32 to vector<64x1xf32>
    %77 = arith.cmpf oge, %75, %76 : vector<64x1xf32>
    %78 = arith.extui %77 : vector<64x1xi1> to vector<64x1xi32>
    %79 = arith.sitofp %78 : vector<64x1xi32> to vector<64x1xf32>
    %80 = tpu.iota {dimensions = array<i32: 1>} : vector<64x128xi32>
    %c0_i32 = arith.constant 0 : i32
    %81 = vector.broadcast %c0_i32 : i32 to vector<64x128xi32>
    %82 = arith.cmpi eq, %80, %81 : vector<64x128xi32>
    %cst_14 = arith.constant 0.000000e+00 : f32
    %83 = vector.shape_cast %39 : vector<64x1xf32> to vector<64x1xf32>
    %84 = vector.broadcast %83 : vector<64x1xf32> to vector<64x128xf32>
    %85 = vector.broadcast %cst_14 : f32 to vector<64x128xf32>
    %86 = arith.select %82, %84, %85 : vector<64x128xi1>, vector<64x128xf32>
    %c1_i32 = arith.constant 1 : i32
    %87 = vector.broadcast %c1_i32 : i32 to vector<64x128xi32>
    %88 = arith.cmpi eq, %80, %87 : vector<64x128xi32>
    %89 = vector.shape_cast %47 : vector<64x1xf32> to vector<64x1xf32>
    %90 = vector.broadcast %89 : vector<64x1xf32> to vector<64x128xf32>
    %91 = arith.select %88, %90, %86 : vector<64x128xi1>, vector<64x128xf32>
    %c2_i32 = arith.constant 2 : i32
    %92 = vector.broadcast %c2_i32 : i32 to vector<64x128xi32>
    %93 = arith.cmpi eq, %80, %92 : vector<64x128xi32>
    %94 = vector.shape_cast %55 : vector<64x1xf32> to vector<64x1xf32>
    %95 = vector.broadcast %94 : vector<64x1xf32> to vector<64x128xf32>
    %96 = arith.select %93, %95, %91 : vector<64x128xi1>, vector<64x128xf32>
    %c3_i32 = arith.constant 3 : i32
    %97 = vector.broadcast %c3_i32 : i32 to vector<64x128xi32>
    %98 = arith.cmpi eq, %80, %97 : vector<64x128xi32>
    %99 = vector.shape_cast %75 : vector<64x1xf32> to vector<64x1xf32>
    %100 = vector.broadcast %99 : vector<64x1xf32> to vector<64x128xf32>
    %101 = arith.select %98, %100, %96 : vector<64x128xi1>, vector<64x128xf32>
    %c4_i32 = arith.constant 4 : i32
    %102 = vector.broadcast %c4_i32 : i32 to vector<64x128xi32>
    %103 = arith.cmpi eq, %80, %102 : vector<64x128xi32>
    %104 = vector.shape_cast %79 : vector<64x1xf32> to vector<64x1xf32>
    %105 = vector.broadcast %104 : vector<64x1xf32> to vector<64x128xf32>
    %106 = arith.select %103, %105, %101 : vector<64x128xi1>, vector<64x128xf32>
    %c0_15 = arith.constant 0 : index
    %c0_16 = arith.constant 0 : index
    %107 = vector.load %arg3[%c0_15, %c0_16] : memref<64x128xf32, #tpu.memory_space<vmem>>, vector<64x128xf32>
    tpu.vector_store %arg3[%c0_15, %c0_16], %106 {strides = array<i32>} : memref<64x128xf32, #tpu.memory_space<vmem>>, vector<64x128xf32>,
    return
  }
  func.func @transform_0(%arg0: i32) -> i32 {
    %c0_i32 = arith.constant 0 : i32
    %c0_i32_0 = arith.constant 0 : i32
    return %c0_i32 : i32
  }
  func.func @transform_1(%arg0: i32) -> (i32, i32) {
    %c0_i32 = arith.constant 0 : i32
    %c0_i32_0 = arith.constant 0 : i32
    %c0_i32_1 = arith.constant 0 : i32
    return %c0_i32, %c0_i32_0 : i32, i32
  }
  func.func @transform_2(%arg0: i32) -> (i32, i32) {
    %c0_i32 = arith.constant 0 : i32
    %c0_i32_0 = arith.constant 0 : i32
    return %arg0, %c0_i32 : i32, i32
  }
}

</mosaic_0001>

<llo_original>
// kernel: pallas_vnode_distances.1
$region0: #{pallas_vnode_distances.1}
  #allocation0 [shape = 'u32[]', space=smem, size = 0x4, offset = 0x4, fixed_abs, tag = 'smem constant byte address 0x4 - core index']
  #allocation1 [shape = 'u32[144,128]{1,0:T(1,128)}', space=vmem, size = 0x12000, scoped, tag = 'internal scratch']
  %s0 = inlined_call_operand.vmem [shape: f32[9], index: 0, kind: input, shape index: {}]
  %s1 = inlined_call_operand.vmem [shape: f32[8,128], index: 1, kind: input, shape index: {}]
  %s2 = inlined_call_operand.hbm [shape: f32[64,128], index: 2, kind: output, shape index: {}]
  %s3 = sld [smem:[#allocation0]]
  $region22: #{pallas_vnode_distances.1} parent=0
    _
  %s5 = ssub.s32 1, %s3
  %s6 = scalar_select 0, %s5, %s3
  $region1: #{pallas_vnode_distances.1} parent=0
    #allocation2 [shape = 'u8[512]{0}', space=smem, size = 0x200, scoped, tag = 'input window, operand 0, single buffered']
    #allocation3 [shape = 's32[1]{0}', space=sflag, size = 0x4, scoped, tag = 'scoped memory for pallas_vnode_distances.1']
    #allocation4 [shape = 's32[1]{0}', space=sflag, size = 0x4, scoped, tag = 'scoped memory for pallas_vnode_distances.1']
    #allocation5 [shape = 'u8[32768]{0}', space=vmem, size = 0x8000, scoped, tag = 'output window, operand 0, single buffered']
    %7 = vsyncpa [#allocation4], 0
    %8 = vsyncpa [#allocation3], 0
    // Predicated region
    $region2: #{pallas_vnode_distances.1} parent=1 // pred_check
      _
    $region3: #{pallas_vnode_distances.1} parent=1 // pred_check_branch
      %10 = sbr.rel (0) target = $region5
    $region4: #{pallas_vnode_distances.1} parent=1 // pred_region
      %s12 = ssub.s32 16, 16
      %13 = vsyncadd [#allocation4], %s12
      %s15 = sshll.u32 %s0, 4
      %s16 = int_to_ptr.vmem [resolvable:$true] %s15
      %18 = dma.vmem_to_smem %s16, 16, [#allocation2], [#allocation4]
    $region5: #{pallas_vnode_distances.1} parent=1 // pred_fallthru
      _
    // Predicated region
    $region6: #{pallas_vnode_distances.1} parent=1 // pred_check
      _
    $region7: #{pallas_vnode_distances.1} parent=1 // pred_check_branch
      %20 = sbr.rel (0) target = $region9
    $region8: #{pallas_vnode_distances.1} parent=1 // pred_region
      _
    $region9: #{pallas_vnode_distances.1} parent=1 // pred_fallthru
      _
    // Predicated region
    $region10: #{pallas_vnode_distances.1} parent=1 // pred_check
      _
    $region11: #{pallas_vnode_distances.1} parent=1 // pred_check_branch
      %22 = sbr.rel (0) target = $region13
    $region12: #{pallas_vnode_distances.1} parent=1 // pred_region
      %23 = dma.done [#allocation4], 16
    $region13: #{pallas_vnode_distances.1} parent=1 // pred_fallthru
      _
    %24 = sfence
    %s25 = smul.u32 0, 64
    %v26 = vlaneseq
    %v27 = vshrl.u32 %v26, 7
    %v28 = vadd.s32 %v27, 8
    %v29 = vadd.s32 %v27, 16
    %v30 = vadd.s32 %v27, 24
    %v31 = vadd.s32 %v27, 32
    %v32 = vadd.s32 %v27, 40
    %v33 = vadd.s32 %v27, 48
    %v34 = vadd.s32 %v27, 56
    %v35 = vstv %s25
    %v36 = vadd.s32 %v27, %v35
    %v37 = vadd.s32 %v28, %v35
    %v38 = vadd.s32 %v29, %v35
    %v39 = vadd.s32 %v30, %v35
    %v40 = vadd.s32 %v31, %v35
    %v41 = vadd.s32 %v32, %v35
    %v42 = vadd.s32 %v33, %v35
    %v43 = vadd.s32 %v34, %v35
    %v44 = vcvt.s32.f32 %v36
    %v45 = vcvt.s32.f32 %v37
    %v46 = vcvt.s32.f32 %v38
    %v47 = vcvt.s32.f32 %v39
    %v48 = vcvt.s32.f32 %v40
    %v49 = vcvt.s32.f32 %v41
    %v50 = vcvt.s32.f32 %v42
    %v51 = vcvt.s32.f32 %v43
    %v52 = vrcp.pop 16.0
    %v53 = vmul.f32 %v44, %v52
    %v54 = vmul.f32 %v45, %v52
    %v55 = vmul.f32 %v46, %v52
    %v56 = vmul.f32 %v47, %v52
    %v57 = vmul.f32 %v48, %v52
    %v58 = vmul.f32 %v49, %v52
    %v59 = vmul.f32 %v50, %v52
    %v60 = vmul.f32 %v51, %v52
    %v61 = vfloor.f32 %v53
    %v62 = vfloor.f32 %v54
    %v63 = vfloor.f32 %v55
    %v64 = vfloor.f32 %v56
    %v65 = vfloor.f32 %v57
    %v66 = vfloor.f32 %v58
    %v67 = vfloor.f32 %v59
    %v68 = vfloor.f32 %v60
    %v69 = vmul.f32 %v61, 16.0
    %v70 = vmul.f32 %v62, 16.0
    %v71 = vmul.f32 %v63, 16.0
    %v72 = vmul.f32 %v64, 16.0
    %v73 = vmul.f32 %v65, 16.0
    %v74 = vmul.f32 %v66, 16.0
    %v75 = vmul.f32 %v67, 16.0
    %v76 = vmul.f32 %v68, 16.0
    %v77 = vsub.f32 %v44, %v69
    %v78 = vsub.f32 %v45, %v70
    %v79 = vsub.f32 %v46, %v71
    %v80 = vsub.f32 %v47, %v72
    %v81 = vsub.f32 %v48, %v73
    %v82 = vsub.f32 %v49, %v74
    %v83 = vsub.f32 %v50, %v75
    %v84 = vsub.f32 %v51, %v76
    %v85 = vrcp.pop 4.0
    %v86 = vmul.f32 %v77, %v85
    %v87 = vmul.f32 %v78, %v85
    %v88 = vmul.f32 %v79, %v85
    %v89 = vmul.f32 %v80, %v85
    %v90 = vmul.f32 %v81, %v85
    %v91 = vmul.f32 %v82, %v85
    %v92 = vmul.f32 %v83, %v85
    %v93 = vmul.f32 %v84, %v85
    %v94 = vfloor.f32 %v86
    %v95 = vfloor.f32 %v87
    %v96 = vfloor.f32 %v88
    %v97 = vfloor.f32 %v89
    %v98 = vfloor.f32 %v90
    %v99 = vfloor.f32 %v91
    %v100 = vfloor.f32 %v92
    %v101 = vfloor.f32 %v93
    %v102 = vmul.f32 %v94, 4.0
    %v103 = vmul.f32 %v95, 4.0
    %v104 = vmul.f32 %v96, 4.0
    %v105 = vmul.f32 %v97, 4.0
    %v106 = vmul.f32 %v98, 4.0
    %v107 = vmul.f32 %v99, 4.0
    %v108 = vmul.f32 %v100, 4.0
    %v109 = vmul.f32 %v101, 4.0
    %v110 = vsub.f32 %v77, %v102
    %v111 = vsub.f32 %v78, %v103
    %v112 = vsub.f32 %v79, %v104
    %v113 = vsub.f32 %v80, %v105
    %v114 = vsub.f32 %v81, %v106
    %v115 = vsub.f32 %v82, %v107
    %v116 = vsub.f32 %v83, %v108
    %v117 = vsub.f32 %v84, %v109
    %v118 = vmul.f32 %v61, %v85
    %v119 = vmul.f32 %v62, %v85
    %v120 = vmul.f32 %v63, %v85
    %v121 = vmul.f32 %v64, %v85
    %v122 = vmul.f32 %v65, %v85
    %v123 = vmul.f32 %v66, %v85
    %v124 = vmul.f32 %v67, %v85
    %v125 = vmul.f32 %v68, %v85
    %v126 = vmul.f32 %v94, %v85
    %v127 = vmul.f32 %v95, %v85
    %v128 = vmul.f32 %v96, %v85
    %v129 = vmul.f32 %v97, %v85
    %v130 = vmul.f32 %v98, %v85
    %v131 = vmul.f32 %v99, %v85
    %v132 = vmul.f32 %v100, %v85
    %v133 = vmul.f32 %v101, %v85
    %v134 = vmul.f32 %v110, %v85
    %v135 = vmul.f32 %v111, %v85
    %v136 = vmul.f32 %v112, %v85
    %v137 = vmul.f32 %v113, %v85
    %v138 = vmul.f32 %v114, %v85
    %v139 = vmul.f32 %v115, %v85
    %v140 = vmul.f32 %v116, %v85
    %v141 = vmul.f32 %v117, %v85
    %s142 = sld [smem:[#allocation2]]
    %s143 = sld [smem:[#allocation2 + $0x1]]
    %s144 = sld [smem:[#allocation2 + $0x2]]
    %s145 = sld [smem:[#allocation2 + $0x3]]
    %s146 = sld [smem:[#allocation2 + $0x4]]
    %s147 = sld [smem:[#allocation2 + $0x5]]
    %s148 = sld [smem:[#allocation2 + $0x6]]
    %s149 = sld [smem:[#allocation2 + $0x7]]
    %s150 = sld [smem:[#allocation2 + $0x8]]
    %v151 = vstv %s142
    %v152 = vmul.f32 %v118, %v151
    %v153 = vmul.f32 %v119, %v151
    %v154 = vmul.f32 %v120, %v151
    %v155 = vmul.f32 %v121, %v151
    %v156 = vmul.f32 %v122, %v151
    %v157 = vmul.f32 %v123, %v151
    %v158 = vmul.f32 %v124, %v151
    %v159 = vmul.f32 %v125, %v151
    %v160 = vstv %s145
    %v161 = vmul.f32 %v126, %v160
    %v162 = vmul.f32 %v127, %v160
    %v163 = vmul.f32 %v128, %v160
    %v164 = vmul.f32 %v129, %v160
    %v165 = vmul.f32 %v130, %v160
    %v166 = vmul.f32 %v131, %v160
    %v167 = vmul.f32 %v132, %v160
    %v168 = vmul.f32 %v133, %v160
    %v169 = vadd.f32 %v152, %v161
    %v170 = vadd.f32 %v153, %v162
    %v171 = vadd.f32 %v154, %v163
    %v172 = vadd.f32 %v155, %v164
    %v173 = vadd.f32 %v156, %v165
    %v174 = vadd.f32 %v157, %v166
    %v175 = vadd.f32 %v158, %v167
    %v176 = vadd.f32 %v159, %v168
    %v177 = vstv %s148
    %v178 = vmul.f32 %v134, %v177
    %v179 = vmul.f32 %v135, %v177
    %v180 = vmul.f32 %v136, %v177
    %v181 = vmul.f32 %v137, %v177
    %v182 = vmul.f32 %v138, %v177
    %v183 = vmul.f32 %v139, %v177
    %v184 = vmul.f32 %v140, %v177
    %v185 = vmul.f32 %v141, %v177
    %v186 = vadd.f32 %v169, %v178
    %v187 = vadd.f32 %v170, %v179
    %v188 = vadd.f32 %v171, %v180
    %v189 = vadd.f32 %v172, %v181
    %v190 = vadd.f32 %v173, %v182
    %v191 = vadd.f32 %v174, %v183
    %v192 = vadd.f32 %v175, %v184
    %v193 = vadd.f32 %v176, %v185
    %v194 = vstv %s143
    %v195 = vmul.f32 %v118, %v194
    %v196 = vmul.f32 %v119, %v194
    %v197 = vmul.f32 %v120, %v194
    %v198 = vmul.f32 %v121, %v194
    %v199 = vmul.f32 %v122, %v194
    %v200 = vmul.f32 %v123, %v194
    %v201 = vmul.f32 %v124, %v194
    %v202 = vmul.f32 %v125, %v194
    %v203 = vstv %s146
    %v204 = vmul.f32 %v126, %v203
    %v205 = vmul.f32 %v127, %v203
    %v206 = vmul.f32 %v128, %v203
    %v207 = vmul.f32 %v129, %v203
    %v208 = vmul.f32 %v130, %v203
    %v209 = vmul.f32 %v131, %v203
    %v210 = vmul.f32 %v132, %v203
    %v211 = vmul.f32 %v133, %v203
    %v212 = vadd.f32 %v195, %v204
    %v213 = vadd.f32 %v196, %v205
    %v214 = vadd.f32 %v197, %v206
    %v215 = vadd.f32 %v198, %v207
    %v216 = vadd.f32 %v199, %v208
    %v217 = vadd.f32 %v200, %v209
    %v218 = vadd.f32 %v201, %v210
    %v219 = vadd.f32 %v202, %v211
    %v220 = vstv %s149
    %v221 = vmul.f32 %v134, %v220
    %v222 = vmul.f32 %v135, %v220
    %v223 = vmul.f32 %v136, %v220
    %v224 = vmul.f32 %v137, %v220
    %v225 = vmul.f32 %v138, %v220
    %v226 = vmul.f32 %v139, %v220
    %v227 = vmul.f32 %v140, %v220
    %v228 = vmul.f32 %v141, %v220
    %v229 = vadd.f32 %v212, %v221
    %v230 = vadd.f32 %v213, %v222
    %v231 = vadd.f32 %v214, %v223
    %v232 = vadd.f32 %v215, %v224
    %v233 = vadd.f32 %v216, %v225
    %v234 = vadd.f32 %v217, %v226
    %v235 = vadd.f32 %v218, %v227
    %v236 = vadd.f32 %v219, %v228
    %v237 = vstv %s144
    %v238 = vmul.f32 %v118, %v237
    %v239 = vmul.f32 %v119, %v237
    %v240 = vmul.f32 %v120, %v237
    %v241 = vmul.f32 %v121, %v237
    %v242 = vmul.f32 %v122, %v237
    %v243 = vmul.f32 %v123, %v237
    %v244 = vmul.f32 %v124, %v237
    %v245 = vmul.f32 %v125, %v237
    %v246 = vstv %s147
    %v247 = vmul.f32 %v126, %v246
    %v248 = vmul.f32 %v127, %v246
    %v249 = vmul.f32 %v128, %v246
    %v250 = vmul.f32 %v129, %v246
    %v251 = vmul.f32 %v130, %v246
    %v252 = vmul.f32 %v131, %v246
    %v253 = vmul.f32 %v132, %v246
    %v254 = vmul.f32 %v133, %v246
    %v255 = vadd.f32 %v238, %v247
    %v256 = vadd.f32 %v239, %v248
    %v257 = vadd.f32 %v240, %v249
    %v258 = vadd.f32 %v241, %v250
    %v259 = vadd.f32 %v242, %v251
    %v260 = vadd.f32 %v243, %v252
    %v261 = vadd.f32 %v244, %v253
    %v262 = vadd.f32 %v245, %v254
    %v263 = vstv %s150
    %v264 = vmul.f32 %v134, %v263
    %v265 = vmul.f32 %v135, %v263
    %v266 = vmul.f32 %v136, %v263
    %v267 = vmul.f32 %v137, %v263
    %v268 = vmul.f32 %v138, %v263
    %v269 = vmul.f32 %v139, %v263
    %v270 = vmul.f32 %v140, %v263
    %v271 = vmul.f32 %v141, %v263
    %v272 = vadd.f32 %v255, %v264
    %v273 = vadd.f32 %v256, %v265
    %v274 = vadd.f32 %v257, %v266
    %v275 = vadd.f32 %v258, %v267
    %v276 = vadd.f32 %v259, %v268
    %v277 = vadd.f32 %v260, %v269
    %v278 = vadd.f32 %v261, %v270
    %v279 = vadd.f32 %v262, %v271
    %v280 = vld [vmem:[%s1] sm:$0x1]
    %v281 = vld [vmem:[%s1 + $0x1] sm:$0x1]
    %v282 = vld [vmem:[%s1 + $0x2] sm:$0x1]
    %v283 = vlaneseq
    %v284 = vshrl.u32 %v283, 7
    %v285 = vsub.s32 0, %v284
    %v286 = vrot.slane %v280, %v285
    %v287 = vsub.f32 %v186, %v286
    %v288 = vsub.f32 %v187, %v286
    %v289 = vsub.f32 %v188, %v286
    %v290 = vsub.f32 %v189, %v286
    %v291 = vsub.f32 %v190, %v286
    %v292 = vsub.f32 %v191, %v286
    %v293 = vsub.f32 %v192, %v286
    %v294 = vsub.f32 %v193, %v286
    %v295 = vlaneseq
    %v296 = vshrl.u32 %v295, 7
    %v297 = vsub.s32 0, %v296
    %v298 = vrot.slane %v281, %v297
    %v299 = vsub.f32 %v229, %v298
    %v300 = vsub.f32 %v230, %v298
    %v301 = vsub.f32 %v231, %v298
    %v302 = vsub.f32 %v232, %v298
    %v303 = vsub.f32 %v233, %v298
    %v304 = vsub.f32 %v234, %v298
    %v305 = vsub.f32 %v235, %v298
    %v306 = vsub.f32 %v236, %v298
    %v307 = vlaneseq
    %v308 = vshrl.u32 %v307, 7
    %v309 = vsub.s32 0, %v308
    %v310 = vrot.slane %v282, %v309
    %v311 = vsub.f32 %v272, %v310
    %v312 = vsub.f32 %v273, %v310
    %v313 = vsub.f32 %v274, %v310
    %v314 = vsub.f32 %v275, %v310
    %v315 = vsub.f32 %v276, %v310
    %v316 = vsub.f32 %v277, %v310
    %v317 = vsub.f32 %v278, %v310
    %v318 = vsub.f32 %v279, %v310
    %v319 = vmul.f32 %v287, %v287
    %v320 = vmul.f32 %v288, %v288
    %v321 = vmul.f32 %v289, %v289
    %v322 = vmul.f32 %v290, %v290
    %v323 = vmul.f32 %v291, %v291
    %v324 = vmul.f32 %v292, %v292
    %v325 = vmul.f32 %v293, %v293
    %v326 = vmul.f32 %v294, %v294
    %v327 = vmul.f32 %v299, %v299
    %v328 = vmul.f32 %v300, %v300
    %v329 = vmul.f32 %v301, %v301
    %v330 = vmul.f32 %v302, %v302
    %v331 = vmul.f32 %v303, %v303
    %v332 = vmul.f32 %v304, %v304
    %v333 = vmul.f32 %v305, %v305
    %v334 = vmul.f32 %v306, %v306
    %v335 = vadd.f32 %v319, %v327
    %v336 = vadd.f32 %v320, %v328
    %v337 = vadd.f32 %v321, %v329
    %v338 = vadd.f32 %v322, %v330
    %v339 = vadd.f32 %v323, %v331
    %v340 = vadd.f32 %v324, %v332
    %v341 = vadd.f32 %v325, %v333
    %v342 = vadd.f32 %v326, %v334
    %v343 = vmul.f32 %v311, %v311
    %v344 = vmul.f32 %v312, %v312
    %v345 = vmul.f32 %v313, %v313
    %v346 = vmul.f32 %v314, %v314
    %v347 = vmul.f32 %v315, %v315
    %v348 = vmul.f32 %v316, %v316
    %v349 = vmul.f32 %v317, %v317
    %v350 = vmul.f32 %v318, %v318
    %v351 = vadd.f32 %v335, %v343
    %v352 = vadd.f32 %v336, %v344
    %v353 = vadd.f32 %v337, %v345
    %v354 = vadd.f32 %v338, %v346
    %v355 = vadd.f32 %v339, %v347
    %v356 = vadd.f32 %v340, %v348
    %v357 = vadd.f32 %v341, %v349
    %v358 = vadd.f32 %v342, %v350
    %359 = vmin.xlane.f32.xlu0 %v351
    %v360 = vpop.xlane.xlu0 %359
    %361 = vmin.xlane.f32.xlu0 %v352
    %v362 = vpop.xlane.xlu0 %361
    %363 = vmin.xlane.f32.xlu0 %v353
    %v364 = vpop.xlane.xlu0 %363
    %365 = vmin.xlane.f32.xlu0 %v354
    %v366 = vpop.xlane.xlu0 %365
    %367 = vmin.xlane.f32.xlu0 %v355
    %v368 = vpop.xlane.xlu0 %367
    %369 = vmin.xlane.f32.xlu0 %v356
    %v370 = vpop.xlane.xlu0 %369
    %371 = vmin.xlane.f32.xlu0 %v357
    %v372 = vpop.xlane.xlu0 %371
    %373 = vmin.xlane.f32.xlu0 %v358
    %v374 = vpop.xlane.xlu0 %373
    %v375 = vrsqrt.pop %v360
    %v376 = vmul.f32 %v360, %v375
    %vm377 = vcmp.eq.f32.partialorder %v360, inf
    %v378 = vsel %vm377, %v360, %v376
    %vm379 = vcmp.eq.f32.partialorder %v360, 0.0
    %v380 = vand.u32 %v360, 2147483648
    %v381 = vsel %vm379, %v380, %v378
    %v382 = vrsqrt.pop %v362
    %v383 = vmul.f32 %v362, %v382
    %vm384 = vcmp.eq.f32.partialorder %v362, inf
    %v385 = vsel %vm384, %v362, %v383
    %vm386 = vcmp.eq.f32.partialorder %v362, 0.0
    %v387 = vand.u32 %v362, 2147483648
    %v388 = vsel %vm386, %v387, %v385
    %v389 = vrsqrt.pop %v364
    %v390 = vmul.f32 %v364, %v389
    %vm391 = vcmp.eq.f32.partialorder %v364, inf
    %v392 = vsel %vm391, %v364, %v390
    %vm393 = vcmp.eq.f32.partialorder %v364, 0.0
    %v394 = vand.u32 %v364, 2147483648
    %v395 = vsel %vm393, %v394, %v392
    %v396 = vrsqrt.pop %v366
    %v397 = vmul.f32 %v366, %v396
    %vm398 = vcmp.eq.f32.partialorder %v366, inf
    %v399 = vsel %vm398, %v366, %v397
    %vm400 = vcmp.eq.f32.partialorder %v366, 0.0
    %v401 = vand.u32 %v366, 2147483648
    %v402 = vsel %vm400, %v401, %v399
    %v403 = vrsqrt.pop %v368
    %v404 = vmul.f32 %v368, %v403
    %vm405 = vcmp.eq.f32.partialorder %v368, inf
    %v406 = vsel %vm405, %v368, %v404
    %vm407 = vcmp.eq.f32.partialorder %v368, 0.0
    %v408 = vand.u32 %v368, 2147483648
    %v409 = vsel %vm407, %v408, %v406
    %v410 = vrsqrt.pop %v370
    %v411 = vmul.f32 %v370, %v410
    %vm412 = vcmp.eq.f32.partialorder %v370, inf
    %v413 = vsel %vm412, %v370, %v411
    %vm414 = vcmp.eq.f32.partialorder %v370, 0.0
    %v415 = vand.u32 %v370, 2147483648
    %v416 = vsel %vm414, %v415, %v413
    %v417 = vrsqrt.pop %v372
    %v418 = vmul.f32 %v372, %v417
    %vm419 = vcmp.eq.f32.partialorder %v372, inf
    %v420 = vsel %vm419, %v372, %v418
    %vm421 = vcmp.eq.f32.partialorder %v372, 0.0
    %v422 = vand.u32 %v372, 2147483648
    %v423 = vsel %vm421, %v422, %v420
    %v424 = vrsqrt.pop %v374
    %v425 = vmul.f32 %v374, %v424
    %vm426 = vcmp.eq.f32.partialorder %v374, inf
    %v427 = vsel %vm426, %v374, %v425
    %vm428 = vcmp.eq.f32.partialorder %v374, 0.0
    %v429 = vand.u32 %v374, 2147483648
    %v430 = vsel %vm428, %v429, %v427
    %vm431 = vcmp.ge.f32.partialorder %v381, 1.5
    %vm432 = vcmp.ge.f32.partialorder %v388, 1.5
    %vm433 = vcmp.ge.f32.partialorder %v395, 1.5
    %vm434 = vcmp.ge.f32.partialorder %v402, 1.5
    %vm435 = vcmp.ge.f32.partialorder %v409, 1.5
    %vm436 = vcmp.ge.f32.partialorder %v416, 1.5
    %vm437 = vcmp.ge.f32.partialorder %v423, 1.5
    %vm438 = vcmp.ge.f32.partialorder %v430, 1.5
    %v439 = vsel %vm431, 1, 0
    %v440 = vsel %vm432, 1, 0
    %v441 = vsel %vm433, 1, 0
    %v442 = vsel %vm434, 1, 0
    %v443 = vsel %vm435, 1, 0
    %v444 = vsel %vm436, 1, 0
    %v445 = vsel %vm437, 1, 0
    %v446 = vsel %vm438, 1, 0
    %v447 = vcvt.s32.f32 %v439
    %v448 = vcvt.s32.f32 %v440
    %v449 = vcvt.s32.f32 %v441
    %v450 = vcvt.s32.f32 %v442
    %v451 = vcvt.s32.f32 %v443
    %v452 = vcvt.s32.f32 %v444
    %v453 = vcvt.s32.f32 %v445
    %v454 = vcvt.s32.f32 %v446
    %v455 = vlaneseq
    %v456 = vand.u32 %v455, 127
    %vm457 = vcmp.eq.s32.totalorder %v456, 0
    %v458 = vsel %vm457, %v186, 0.0
    %v459 = vsel %vm457, %v187, 0.0
    %v460 = vsel %vm457, %v188, 0.0
    %v461 = vsel %vm457, %v189, 0.0
    %v462 = vsel %vm457, %v190, 0.0
    %v463 = vsel %vm457, %v191, 0.0
    %v464 = vsel %vm457, %v192, 0.0
    %v465 = vsel %vm457, %v193, 0.0
    %vm466 = vcmp.eq.s32.totalorder %v456, 1
    %v467 = vsel %vm466, %v229, %v458
    %v468 = vsel %vm466, %v230, %v459
    %v469 = vsel %vm466, %v231, %v460
    %v470 = vsel %vm466, %v232, %v461
    %v471 = vsel %vm466, %v233, %v462
    %v472 = vsel %vm466, %v234, %v463
    %v473 = vsel %vm466, %v235, %v464
    %v474 = vsel %vm466, %v236, %v465
    %vm475 = vcmp.eq.s32.totalorder %v456, 2
    %v476 = vsel %vm475, %v272, %v467
    %v477 = vsel %vm475, %v273, %v468
    %v478 = vsel %vm475, %v274, %v469
    %v479 = vsel %vm475, %v275, %v470
    %v480 = vsel %vm475, %v276, %v471
    %v481 = vsel %vm475, %v277, %v472
    %v482 = vsel %vm475, %v278, %v473
    %v483 = vsel %vm475, %v279, %v474
    %vm484 = vcmp.eq.s32.totalorder %v456, 3
    %v485 = vsel %vm484, %v381, %v476
    %v486 = vsel %vm484, %v388, %v477
    %v487 = vsel %vm484, %v395, %v478
    %v488 = vsel %vm484, %v402, %v479
    %v489 = vsel %vm484, %v409, %v480
    %v490 = vsel %vm484, %v416, %v481
    %v491 = vsel %vm484, %v423, %v482
    %v492 = vsel %vm484, %v430, %v483
    %vm493 = vcmp.eq.s32.totalorder %v456, 4
    %v494 = vsel %vm493, %v447, %v485
    %v495 = vsel %vm493, %v448, %v486
    %v496 = vsel %vm493, %v449, %v487
    %v497 = vsel %vm493, %v450, %v488
    %v498 = vsel %vm493, %v451, %v489
    %v499 = vsel %vm493, %v452, %v490
    %v500 = vsel %vm493, %v453, %v491
    %v501 = vsel %vm493, %v454, %v492
    %502 = vst [vmem:[#allocation5] sm:$0xff] %v494
    %503 = vst [vmem:[#allocation5 + $0x8] sm:$0xff] %v495
    %504 = vst [vmem:[#allocation5 + $0x10] sm:$0xff] %v496
    %505 = vst [vmem:[#allocation5 + $0x18] sm:$0xff] %v497
    %506 = vst [vmem:[#allocation5 + $0x20] sm:$0xff] %v498
    %507 = vst [vmem:[#allocation5 + $0x28] sm:$0xff] %v499
    %508 = vst [vmem:[#allocation5 + $0x30] sm:$0xff] %v500
    %509 = vst [vmem:[#allocation5 + $0x38] sm:$0xff] %v501
    // Predicated region
    $region14: #{pallas_vnode_distances.1} parent=1 // pred_check
      _
    $region15: #{pallas_vnode_distances.1} parent=1 // pred_check_branch
      %511 = sbr.rel (0) target = $region17
    $region16: #{pallas_vnode_distances.1} parent=1 // pred_region
      %s513 = ssub.s32 1024, 1024
      %514 = vsyncadd [#allocation3], %s513
      %s515 = sshll.u32 [#allocation5], 4
      %s516 = int_to_ptr.vmem [resolvable:$true] %s515
      %521 = dma.vmem_to_hbm [thread:$0]  %s516, 1024, %s2, [#allocation3], 128, 128, 8
    $region17: #{pallas_vnode_distances.1} parent=1 // pred_fallthru
      _
    // Predicated region
    $region18: #{pallas_vnode_distances.1} parent=1 // pred_check
      _
    $region19: #{pallas_vnode_distances.1} parent=1 // pred_check_branch
      %523 = sbr.rel (0) target = $region21
    $region20: #{pallas_vnode_distances.1} parent=1 // pred_region
      %524 = dma.done [#allocation3], 1024
    $region21: #{pallas_vnode_distances.1} parent=1 // pred_fallthru
      _
    %525 = vsyncpa [#allocation3], 1
    %526 = vsyncpa [#allocation4], 1

</llo_original>
